<compile_context>
chip_gen: v7x
topology: tpu7x:2x2x1
jax: 0.10.0
libtpu: 0.0.40
codegen_flags: <defaults>
</compile_context>

<pallas_src>
import functools
import math

import jax
import jax.numpy as jnp
from jax import lax
from jax.experimental import pallas as pl
from jax.experimental.pallas import tpu as pltpu


# ----------------------------- Pallas kernel --------------------------------
def _odconv_matmul_kernel(agg_ref, patch_ref, out_ref, acc_ref):
    """Tiled matmul with f32 accumulator.

    agg_ref   : (1, tN, tK)  bf16  per-batch aggregated weight tile (C_out x CKK)
    patch_ref : (1, tK, tP)  bf16  im2col patch tile (CKK x P)
    out_ref   : (1, tN, tP)  f32   output tile (C_out x P)   -- lane-dense (P on lanes)
    acc_ref   : (tN, tP)     f32   VMEM accumulator (persists across the CKK axis)
    """
    @pl.when(pl.program_id(3) == 0)
    def _():
        acc_ref[...] = jnp.zeros_like(acc_ref)

    acc_ref[...] += jnp.dot(
        agg_ref[0], patch_ref[0], preferred_element_type=jnp.float32
    )

    @pl.when(pl.program_id(3) == pl.num_programs(3) - 1)
    def _():
        out_ref[0] = acc_ref[...].astype(out_ref.dtype)


# ------------------------------- glue (JAX) ----------------------------------
def _round_up(x, m):
    return ((x + m - 1) // m) * m


def _pick_tile(dim, align, max_tile, full_align=None):
    """Pick a tile size (multiple of `align`, <= max_tile) minimizing padding.

    If `full_align` is given and the whole dim (rounded up to `full_align`) fits in
    `max_tile`, use a single full-extent block padded only to `full_align`
    (a block dim equal to the full array dim is exempt from the 128-lane rule).
    Returns (tile, padded_dim) with padded_dim % tile == 0."""
    if full_align is not None:
        full = _round_up(dim, full_align)
        if full <= max_tile:
            return full, full
    full = _round_up(dim, align)
    if full <= max_tile:
        return full, full
    best_t, best_pad = align, _round_up(dim, align)
    t = max_tile
    while t >= align:
        pad = _round_up(dim, t)
        if pad < best_pad or (pad == best_pad and t > best_t):
            best_pad, best_t = pad, t
        t -= align
    return best_t, best_pad


def _extract_patches(x, K, stride, padding, dilation):
    """im2col directly in (B, C*K*K, H_out*W_out) layout (no extra transpose).
    Flat index j = c*K*K + ki*K + kj, matching OIHW weight flattening."""
    B, C, H, W = x.shape
    Hp, Wp = H + 2 * padding, W + 2 * padding
    H_out = (Hp - dilation * (K - 1) - 1) // stride + 1
    W_out = (Wp - dilation * (K - 1) - 1) // stride + 1
    xp = jnp.pad(x, ((0, 0), (0, 0), (padding, padding), (padding, padding)))
    cols = []
    for ki in range(K):
        for kj in range(K):
            r0 = ki * dilation
            c0 = kj * dilation
            sl = xp[:, :,
                    r0:r0 + stride * (H_out - 1) + 1:stride,
                    c0:c0 + stride * (W_out - 1) + 1:stride]       # (B, C, Ho, Wo)
            cols.append(sl)
    p = jnp.stack(cols, axis=2)                                     # (B, C, K*K, Ho, Wo)
    p = p.reshape(B, C * K * K, H_out * W_out)                      # (B, CKK, P)
    return p, H_out, W_out


def _attention_forward(x, params, temperature=1.0):
    """Attention branch (tiny 1x1-conv MLP on globally pooled features)."""
    pooled = jnp.mean(x, axis=(2, 3))                               # (B, C_in)   AdaptiveAvgPool2d(1)
    h = pooled @ params["fc_w"].T                                   # (B, A)      fc (no bias)
    h = h / jnp.sqrt(1.0 + 1e-5)                                    # BatchNorm (eval mode, identity affine)
    h = jnp.maximum(h, 0.0)                                         # ReLU
    ch = jax.nn.sigmoid((h @ params["channel_w"].T + params["channel_b"]) / temperature)   # (B, C_in)
    fl = jax.nn.sigmoid((h @ params["filter_w"].T + params["filter_b"]) / temperature)     # (B, C_out)
    sp = jax.nn.sigmoid((h @ params["spatial_w"].T + params["spatial_b"]) / temperature)   # (B, K*K)
    ka = jax.nn.softmax((h @ params["kernel_w"].T + params["kernel_b"]) / temperature, axis=1)  # (B, kn)
    return ch, fl, sp, ka


@functools.partial(jax.jit, static_argnames=("kernel_size", "stride", "padding", "dilation", "kernel_num"))
def odconv2d_forward(x, params, *, kernel_size, stride, padding, dilation, kernel_num):
    B, C_in, H, W = x.shape
    kn, C_out = params["weight"].shape[0], params["weight"].shape[1]
    K = kernel_size
    KK = K * K
    CKK = C_in * KK

    ch, fl, sp, ka = _attention_forward(x, params)

    # Fold everything into a per-batch aggregated weight (groups=1 only):
    #   conv(x * ch, W) == conv(x, W * ch[in])      (per-input-channel scale commutes)
    #   agg[b] = fl[b,o] * sum_n ka[b,n] * sp[b,s] * ch[b,c] * weight[n,o,c,s]
    w = params["weight"].reshape(kn, C_out, C_in, KK)
    agg = jnp.einsum("bn,nocs->bocs", ka, w)                        # (B, C_out, C_in, KK)
    agg = agg * ch[:, None, :, None] * sp[:, None, None, :]
    agg = agg * fl[:, :, None, None]
    agg = agg.reshape(B, C_out, CKK)                                # (B, C_out, CKK)  f32

    # im2col directly in (B, CKK, P) layout (XLA glue; no transpose copy).
    patches, Ho, Wo = _extract_patches(x, K, stride, padding, dilation)
    P = Ho * Wo

    # ---- tiling: (8,128)-aligned, capped so 2x-buffered tiles fit comfortably in
    #      the default scoped VMEM on every chip (worst case ~7.5 MiB).
    #      Zero padding is matmul-neutral. ----
    tN, C_out_pad = _pick_tile(C_out, 8, 256)                 # sublane dim of agg/out tiles
    tK, CKK_pad = _pick_tile(CKK, 128, 512, full_align=16)    # contraction (lanes of agg, sublanes of patches)
    tP, P_pad = _pick_tile(P, 128, 1024)                      # lane dim of patches/out (lane-dense output)

    agg_p = jnp.pad(agg, ((0, 0), (0, C_out_pad - C_out), (0, CKK_pad - CKK))).astype(jnp.bfloat16)
    patches_p = jnp.pad(patches, ((0, 0), (0, CKK_pad - CKK), (0, P_pad - P))).astype(jnp.bfloat16)

    grid = (B, C_out_pad // tN, P_pad // tP, CKK_pad // tK)

    out = pl.pallas_call(
        _odconv_matmul_kernel,
        out_shape=jax.ShapeDtypeStruct((B, C_out_pad, P_pad), jnp.float32),
        grid=grid,
        in_specs=[
            pl.BlockSpec((1, tN, tK), lambda b, jn, jp, jk: (b, jn, jk)),
            pl.BlockSpec((1, tK, tP), lambda b, jn, jp, jk: (b, jk, jp)),
        ],
        out_specs=pl.BlockSpec((1, tN, tP), lambda b, jn, jp, jk: (b, jn, jp)),
        scratch_shapes=[pltpu.VMEM((tN, tP), jnp.float32)],
        compiler_params=pltpu.CompilerParams(
            dimension_semantics=("parallel", "parallel", "parallel", "arbitrary")),
    )(agg_p, patches_p)

    # Output already (B, C_out, P): slice off padding, reshape to NCHW. No transpose.
    out = out[:, :C_out, :P].reshape(B, C_out, Ho, Wo)
    return out


# ---------------------------- reference (pure JAX) ---------------------------
def _reference(x, params, *, kernel_size, stride, padding, dilation, kernel_num):
    B, C_in, H, W = x.shape
    kn, C_out = params["weight"].shape[0], params["weight"].shape[1]
    K = kernel_size
    ch, fl, sp, ka = _attention_forward(x, params)
    x_scaled = x * ch[:, :, None, None]
    w = params["weight"].reshape(kn, C_out, C_in, K * K)
    agg = jnp.einsum("bn,bs,nois->bois", ka, sp, w).reshape(B, C_out, C_in, K, K)
    outs = []
    for b in range(B):
        o = lax.conv_general_dilated(
            x_scaled[b:b + 1], agg[b],
            window_strides=(stride, stride),
            padding=[(padding, padding), (padding, padding)],
            rhs_dilation=(dilation, dilation),
            dimension_numbers=("NCHW", "OIHW", "NCHW"),
        )
        outs.append(o)
    return jnp.concatenate(outs, axis=0) * fl[:, :, None, None]


# ------------------------------- param init ----------------------------------
def init_params(key, in_planes, out_planes, kernel_size, kernel_num, reduction=0.0625, min_channel=16):
    A = max(int(in_planes * reduction), min_channel)
    K = kernel_size
    keys = jax.random.split(key, 6)

    def kaiming(k, shape, fan_out):
        std = math.sqrt(2.0 / fan_out)
        return std * jax.random.normal(k, shape, dtype=jnp.float32)

    params = {
        # Attention branch (all 1x1 convs, stored as (out, in) matrices)
        "fc_w": kaiming(keys[0], (A, in_planes), fan_out=A),
        "channel_w": kaiming(keys[1], (in_planes, A), fan_out=in_planes),
        "channel_b": jnp.zeros((in_planes,), jnp.float32),
        "filter_w": kaiming(keys[2], (out_planes, A), fan_out=out_planes),
        "filter_b": jnp.zeros((out_planes,), jnp.float32),
        "spatial_w": kaiming(keys[3], (K * K, A), fan_out=K * K),
        "spatial_b": jnp.zeros((K * K,), jnp.float32),
        "kernel_w": kaiming(keys[4], (kernel_num, A), fan_out=kernel_num),
        "kernel_b": jnp.zeros((kernel_num,), jnp.float32),
        # main dynamic-weight bank: (kernel_num, out, in//groups, K, K)
        "weight": kaiming(keys[5], (kernel_num, out_planes, in_planes, K, K),
                          fan_out=out_planes * K * K),
    }
    return params


# ---------------------------------- main --------------------------------------
if __name__ == "__main__":
    # small config: ODConv2d(in_planes=4, out_planes=8, kernel_size=3, stride=1,
    #                        padding=1, dilation=1, groups=1, kernel_num=4)
    B, C_in, H, W = 2, 4, 16, 16
    C_out, K, stride, padding, dilation, kn = 8, 3, 1, 1, 1, 4

    key = jax.random.PRNGKey(0)
    kx, kp = jax.random.split(key)
    x = jax.random.normal(kx, (B, C_in, H, W), dtype=jnp.float32)
    params = init_params(kp, C_in, C_out, K, kn)

    out = odconv2d_forward(x, params, kernel_size=K, stride=stride,
                           padding=padding, dilation=dilation, kernel_num=kn)
    out = jax.block_until_ready(out)

    ref = _reference(x, params, kernel_size=K, stride=stride,
                     padding=padding, dilation=dilation, kernel_num=kn)
    assert out.shape == (B, C_out, H, W), out.shape

    # bf16 matmul operands (f32 accumulation) -> relaxed tolerance vs f32 reference.
    err = float(jnp.max(jnp.abs(out - ref)))
    scale = float(jnp.max(jnp.abs(ref))) + 1e-6
    assert err <= 2e-2 * scale + 1e-3, (err, scale)

    print("KERNEL_OK")
</pallas_src>

<mosaic_0001>
module attributes {stable_mosaic.version = 11 : i64} {
  func.func @_odconv_matmul_kernel(%arg0: i32, %arg1: i32, %arg2: i32, %arg3: i32, %arg4: memref<1x8x48xbf16, #tpu.memory_space<vmem>>, %arg5: memref<1x48x256xbf16, #tpu.memory_space<vmem>>, %arg6: memref<1x8x256xf32, #tpu.memory_space<vmem>>, %arg7: memref<8x256xf32, #tpu.memory_space<vmem>>) attributes {dimension_semantics = [#tpu.dimension_semantics<parallel>, #tpu.dimension_semantics<parallel>, #tpu.dimension_semantics<parallel>, #tpu.dimension_semantics<arbitrary>], iteration_bounds = array<i64: 2, 1, 1, 1>, scalar_prefetch = 0 : i64, scratch_operands = 1 : i64, tpu.core_type = #tpu.core_type<tc>, window_params = [{transform_indices = @transform_0, window_bounds = array<i64: 1, 8, 48>}, {transform_indices = @transform_1, window_bounds = array<i64: 1, 48, 256>}, {transform_indices = @transform_2, window_bounds = array<i64: 1, 8, 256>}]} {
    %c0_i32 = arith.constant 0 : i32
    %0 = arith.cmpi eq, %arg3, %c0_i32 : i32
    %1 = arith.extui %0 : i1 to i32
    %c0_i32_0 = arith.constant 0 : i32
    %2 = arith.cmpi ne, %1, %c0_i32_0 : i32
    scf.if %2 {
      %cst_12 = arith.constant 0.000000e+00 : f32
      %14 = vector.broadcast %cst_12 : f32 to vector<8x256xf32>
      %c0_13 = arith.constant 0 : index
      %c0_14 = arith.constant 0 : index
      %15 = vector.load %arg7[%c0_13, %c0_14] : memref<8x256xf32, #tpu.memory_space<vmem>>, vector<8x256xf32>
      tpu.vector_store %arg7[%c0_13, %c0_14], %14 {strides = array<i32>} : memref<8x256xf32, #tpu.memory_space<vmem>>, vector<8x256xf32>,
    } else {
    }
    %c0 = arith.constant 0 : index
    %c0_1 = arith.constant 0 : index
    %3 = vector.load %arg7[%c0, %c0_1] : memref<8x256xf32, #tpu.memory_space<vmem>>, vector<8x256xf32>
    %c0_2 = arith.constant 0 : index
    %c0_3 = arith.constant 0 : index
    %c0_4 = arith.constant 0 : index
    %4 = vector.load %arg4[%c0_2, %c0_3, %c0_4] : memref<1x8x48xbf16, #tpu.memory_space<vmem>>, vector<1x8x48xbf16>
    %5 = vector.shape_cast %4 : vector<1x8x48xbf16> to vector<8x48xbf16>
    %c0_5 = arith.constant 0 : index
    %c0_6 = arith.constant 0 : index
    %c0_7 = arith.constant 0 : index
    %6 = vector.load %arg5[%c0_5, %c0_6, %c0_7] : memref<1x48x256xbf16, #tpu.memory_space<vmem>>, vector<1x48x256xbf16>
    %7 = vector.shape_cast %6 : vector<1x48x256xbf16> to vector<48x256xbf16>
    %cst = arith.constant dense<0.000000e+00> : vector<8x256xf32>
    %8 = tpu.matmul %5, %7, %cst {dimension_numbers = #tpu.dot_dimension_numbers<[1], [0], [0], [1], [0, 0, 1, 1], [], []>} : vector<8x48xbf16>, vector<48x256xbf16>, vector<8x256xf32> -> vector<8x256xf32>
    %9 = arith.addf %3, %8 : vector<8x256xf32>
    %c0_8 = arith.constant 0 : index
    %c0_9 = arith.constant 0 : index
    %10 = vector.load %arg7[%c0_8, %c0_9] : memref<8x256xf32, #tpu.memory_space<vmem>>, vector<8x256xf32>
    tpu.vector_store %arg7[%c0_8, %c0_9], %9 {strides = array<i32>} : memref<8x256xf32, #tpu.memory_space<vmem>>, vector<8x256xf32>,
    %c0_i32_10 = arith.constant 0 : i32
    %11 = arith.cmpi eq, %arg3, %c0_i32_10 : i32
    %12 = arith.extui %11 : i1 to i32
    %c0_i32_11 = arith.constant 0 : i32
    %13 = arith.cmpi ne, %12, %c0_i32_11 : i32
    scf.if %13 {
      %c0_12 = arith.constant 0 : index
      %c0_13 = arith.constant 0 : index
      %14 = vector.load %arg7[%c0_12, %c0_13] : memref<8x256xf32, #tpu.memory_space<vmem>>, vector<8x256xf32>
      %c0_14 = arith.constant 0 : index
      %c0_15 = arith.constant 0 : index
      %c0_16 = arith.constant 0 : index
      %15 = vector.load %arg6[%c0_14, %c0_15, %c0_16] : memref<1x8x256xf32, #tpu.memory_space<vmem>>, vector<1x8x256xf32>
      %16 = vector.shape_cast %15 : vector<1x8x256xf32> to vector<8x256xf32>
      %17 = vector.shape_cast %14 : vector<8x256xf32> to vector<1x8x256xf32>
      tpu.vector_store %arg6[%c0_14, %c0_15, %c0_16], %17 {strides = array<i32>} : memref<1x8x256xf32, #tpu.memory_space<vmem>>, vector<1x8x256xf32>,
    } else {
    }
    return
  }
  func.func @transform_0(%arg0: i32, %arg1: i32, %arg2: i32, %arg3: i32) -> (i32, i32, i32) {
    %c0_i32 = arith.constant 0 : i32
    return %arg0, %arg1, %arg3 : i32, i32, i32
  }
  func.func @transform_1(%arg0: i32, %arg1: i32, %arg2: i32, %arg3: i32) -> (i32, i32, i32) {
    %c0_i32 = arith.constant 0 : i32
    return %arg0, %arg3, %arg2 : i32, i32, i32
  }
  func.func @transform_2(%arg0: i32, %arg1: i32, %arg2: i32, %arg3: i32) -> (i32, i32, i32) {
    %c0_i32 = arith.constant 0 : i32
    return %arg0, %arg1, %arg2 : i32, i32, i32
  }
}

</mosaic_0001>

<llo_original>
// kernel: odconv2d_forward.1
$region0: #{odconv2d_forward.1}
  #allocation0 [shape = 'u32[]', space=smem, size = 0x4, offset = 0x4, fixed_abs, tag = 'smem constant byte address 0x4 - core index']
  #allocation1 [shape = 'u32[144,128]{1,0:T(1,128)}', space=vmem, size = 0x12000, scoped, tag = 'internal scratch']
  #allocation2 [shape = 'f32[8,256]{1,0:T(8,128)}', space=vmem, size = 0x2000, scoped, tag = 'scratch operand']
  %s0 = inlined_call_operand.vmem [shape: bf16[2,8,48], index: 0, kind: input, shape index: {}]
  %s1 = inlined_call_operand.vmem [shape: bf16[2,48,256], index: 1, kind: input, shape index: {}]
  %s2 = inlined_call_operand.vmem [shape: f32[2,8,256], index: 2, kind: output, shape index: {}]
  %s3 = sld [smem:[#allocation0]]
  $region49: #{odconv2d_forward.1} parent=0
    _
  %s5 = ssub.s32 1, %s3
  %s6 = scalar_select 0, %s5, %s3
  loop: start=0, step=1, limit=4
  $region2: #{odconv2d_forward.1} parent=0 // loop_pre_header
    _
  $region3: #{odconv2d_forward.1} parent=0 // loop_header
    %s8 = sphi 0, %s12
    %p9 = scmp.ge.s32.totalorder %s8, 4
    %s15 = sphi 0, %s41
    %s16 = sphi 0, %s37
    %s17 = sphi 0, %s33
    %s18 = sphi 0, %s29
    %s19 = sphi 0, %s15
    %s20 = sphi 0, %s16
    %s21 = sphi 0, %s17
    %s22 = sphi 0, %s18
    %s23 = sphi 0, %s19
    %s24 = sphi 0, %s20
    %s25 = sphi 0, %s21
    %s26 = sphi 0, %s22
    %s48 = sphi 0, %s50
    %s51 = sphi 0, %s48
    %s52 = sphi 0, %s51
    %s68 = sphi 0, %s52
    %s78 = sphi 0, %s80
    %s81 = sphi 0, %s78
    %s82 = sphi 0, %s81
    %s98 = sphi 0, %s82
    %s108 = sphi 0, %s110
    %s111 = sphi 0, %s108
    %s112 = sphi 0, %s111
    %s128 = sphi 0, %s112
  $region4: #{odconv2d_forward.1} parent=0 // loop_header_branch
    %11 = sbr.rel (%p9) target = $region8
  $region5: #{odconv2d_forward.1} parent=0 // loop_body
    %s13 = ssub.s32 %s8, 1
    %s14 = ssub.s32 %s8, 2
    %s27 = sadd.s32 1, %s18
    %p28 = scmp.ge.s32.totalorder %s27, 1
    %s29 = scalar_select %p28, 0, %s27
    %s30 = sadd.s32 1, %s17
    %s31 = scalar_select %p28, %s30, %s17
    %p32 = scmp.ge.s32.totalorder %s31, 1
    %s33 = scalar_select %p32, 0, %s31
    %s34 = sadd.s32 1, %s16
    %s35 = scalar_select %p32, %s34, %s16
    %p36 = scmp.ge.s32.totalorder %s35, 1
    %s37 = scalar_select %p36, 0, %s35
    %s38 = sadd.s32 1, %s15
    %s39 = scalar_select %p36, %s38, %s15
    %p40 = scmp.ge.s32.totalorder %s39, 2
    %s41 = scalar_select %p40, 0, %s39
    %s42 = ssub.s32 %s15, %s41
    %s43 = ssub.s32 %s16, %s37
    %s44 = sor.u32 %s42, %s43
    %s45 = ssub.s32 %s18, %s29
    %s46 = sor.u32 %s44, %s45
    %p47 = scmp.eq.s32.totalorder %s46, 0
    %s49 = sadd.s32 %s48, 1
    %s50 = scalar_select %p47, %s48, %s49
    %p53 = pneg %p47
    %p54 = scmp.eq.s32.totalorder %s8, 1
    %p55 = por %p53, %p54
    %p56 = scmp.ne.s32.totalorder %s48, %s51
    %p57 = scmp.eq.s32.totalorder %s8, 0
    %p58 = por %p56, %p57
    %p59 = scmp.ne.s32.totalorder %s48, %s51
    %p60 = scmp.eq.s32.totalorder %s13, 1
    %p61 = por %p59, %p60
    %p62 = scmp.ne.s32.totalorder %s51, %s52
    %p63 = scmp.eq.s32.totalorder %s13, 0
    %p64 = por %p62, %p63
    %p65 = scmp.ne.s32.totalorder %s51, %s52
    %p66 = scmp.eq.s32.totalorder %s14, 1
    %p67 = por %p65, %p66
    %p69 = scmp.ne.s32.totalorder %s52, %s68
    %p70 = scmp.eq.s32.totalorder %s14, 0
    %p71 = por %p69, %p70
    %s72 = ssub.s32 %s15, %s41
    %s73 = ssub.s32 %s18, %s29
    %s74 = sor.u32 %s72, %s73
    %s75 = ssub.s32 %s17, %s33
    %s76 = sor.u32 %s74, %s75
    %p77 = scmp.eq.s32.totalorder %s76, 0
    %s79 = sadd.s32 %s78, 1
    %s80 = scalar_select %p77, %s78, %s79
    %p83 = pneg %p77
    %p84 = scmp.eq.s32.totalorder %s8, 1
    %p85 = por %p83, %p84
    %p86 = scmp.ne.s32.totalorder %s78, %s81
    %p87 = scmp.eq.s32.totalorder %s8, 0
    %p88 = por %p86, %p87
    %p89 = scmp.ne.s32.totalorder %s78, %s81
    %p90 = scmp.eq.s32.totalorder %s13, 1
    %p91 = por %p89, %p90
    %p92 = scmp.ne.s32.totalorder %s81, %s82
    %p93 = scmp.eq.s32.totalorder %s13, 0
    %p94 = por %p92, %p93
    %p95 = scmp.ne.s32.totalorder %s81, %s82
    %p96 = scmp.eq.s32.totalorder %s14, 1
    %p97 = por %p95, %p96
    %p99 = scmp.ne.s32.totalorder %s82, %s98
    %p100 = scmp.eq.s32.totalorder %s14, 0
    %p101 = por %p99, %p100
    %s102 = ssub.s32 %s15, %s41
    %s103 = ssub.s32 %s16, %s37
    %s104 = sor.u32 %s102, %s103
    %s105 = ssub.s32 %s17, %s33
    %s106 = sor.u32 %s104, %s105
    %p107 = scmp.eq.s32.totalorder %s106, 0
    %s109 = sadd.s32 %s108, 1
    %s110 = scalar_select %p107, %s108, %s109
    %p113 = pneg %p107
    %p114 = scmp.eq.s32.totalorder %s8, 1
    %p115 = por %p113, %p114
    %p116 = scmp.ne.s32.totalorder %s108, %s111
    %p117 = scmp.eq.s32.totalorder %s8, 0
    %p118 = por %p116, %p117
    %p119 = scmp.ne.s32.totalorder %s108, %s111
    %p120 = scmp.eq.s32.totalorder %s13, 1
    %p121 = por %p119, %p120
    %p122 = scmp.ne.s32.totalorder %s111, %s112
    %p123 = scmp.eq.s32.totalorder %s13, 0
    %p124 = por %p122, %p123
    %p125 = scmp.ne.s32.totalorder %s111, %s112
    %p126 = scmp.eq.s32.totalorder %s14, 1
    %p127 = por %p125, %p126
    %p129 = scmp.ne.s32.totalorder %s112, %s128
    %p130 = scmp.eq.s32.totalorder %s14, 0
    %p131 = por %p129, %p130
    %p132 = scmp.le.s32.totalorder 1, %s8
    %p133 = scmp.lt.s32.totalorder %s8, 3
    %p134 = pnand %p132, %p133
    %p135 = pneg %p134
    // Predicated region
    $region9: #{odconv2d_forward.1} parent=5 // pred_check
      _
    $region10: #{odconv2d_forward.1} parent=5 // pred_check_branch
      %137 = sbr.rel (%p134) target = $region12
    $region11: #{odconv2d_forward.1} parent=5 // pred_region
      %s138 = ssub.s32 %s8, 1
    $region12: #{odconv2d_forward.1} parent=5 // pred_fallthru
      _
    %p139 = scmp.lt.s32.totalorder %s8, 2
    // Predicated region
    $region13: #{odconv2d_forward.1} parent=5 // pred_check
      %p140 = pneg %p139
    $region14: #{odconv2d_forward.1} parent=5 // pred_check_branch
      %142 = sbr.rel (%p140) target = $region16
    $region15: #{odconv2d_forward.1} parent=5 // pred_region
      // Predicated region
      $region17: #{odconv2d_forward.1} parent=15 // pred_check
        %p143 = pneg %p58
      $region18: #{odconv2d_forward.1} parent=15 // pred_check_branch
        %145 = sbr.rel (%p143) target = $region20
      $region19: #{odconv2d_forward.1} parent=15 // pred_region
        %p146 = scmp.lt.s32.totalorder %s15, 1
        %s147 = scalar_select %p146, %s15, 1
        %p148 = scmp.lt.s32.totalorder %s16, 0
        %s149 = scalar_select %p148, %s16, 0
        %p150 = scmp.lt.s32.totalorder %s18, 0
        %s151 = scalar_select %p150, %s18, 0
        %s152 = sadd.s32 %s151, %s149
        %s153 = sadd.s32 %s152, %s147
        %s154 = smul.addr %s153, 4
        %s155 = scalar_lea.vmem %s0, %s154
      $region20: #{odconv2d_forward.1} parent=15 // pred_fallthru
        _
      // Predicated region
      $region21: #{odconv2d_forward.1} parent=15 // pred_check
        %p156 = pneg %p88
      $region22: #{odconv2d_forward.1} parent=15 // pred_check_branch
        %158 = sbr.rel (%p156) target = $region24
      $region23: #{odconv2d_forward.1} parent=15 // pred_region
        %s159 = smul.u32 6, %s18
        %s160 = smul.u32 2, %s17
        %p161 = scmp.lt.s32.totalorder %s15, 1
        %s162 = scalar_select %p161, %s15, 1
        %p163 = scmp.lt.s32.totalorder %s159, 5
        %s164 = scalar_select %p163, %s159, 5
        %p165 = scmp.lt.s32.totalorder %s160, 1
        %s166 = scalar_select %p165, %s160, 1
        %s167 = smul.addr %s164, 2
        %s168 = sadd.s32 %s166, %s167
        %s169 = smul.addr %s162, 12
        %s170 = sadd.s32 %s168, %s169
        %s171 = smul.addr %s170, 4
        %s172 = scalar_lea.vmem %s1, %s171
        %s173 = smul.u32 6, %s18
        %s174 = smul.u32 2, %s17
      $region24: #{odconv2d_forward.1} parent=15 // pred_fallthru
        _
    $region16: #{odconv2d_forward.1} parent=5 // pred_fallthru
      _
    %p175 = scmp.le.s32.totalorder 1, %s8
    %p176 = scmp.lt.s32.totalorder %s8, 3
    %p177 = pnand %p175, %p176
    %p178 = pneg %p177
    // Predicated region
    $region25: #{odconv2d_forward.1} parent=5 // pred_check
      _
    $region26: #{odconv2d_forward.1} parent=5 // pred_check_branch
      %180 = sbr.rel (%p177) target = $region28
    $region27: #{odconv2d_forward.1} parent=5 // pred_region
      %s181 = ssub.s32 %s8, 1
      %p182 = scmp.lt.s32.totalorder %s19, 1
      %s183 = scalar_select %p182, %s19, 1
      %p184 = scmp.lt.s32.totalorder %s20, 0
      %s185 = scalar_select %p184, %s20, 0
      %p186 = scmp.lt.s32.totalorder %s22, 0
      %s187 = scalar_select %p186, %s22, 0
      %s188 = sadd.s32 %s187, %s185
      %s189 = sadd.s32 %s188, %s183
      %s190 = smul.addr %s189, 4
      %s191 = scalar_lea.vmem %s0, %s190
      %p192 = pneg %p64
      %p193 = pneg %p61
      %s194 = smul.u32 6, %s22
      %s195 = smul.u32 2, %s21
      %p196 = scmp.lt.s32.totalorder %s19, 1
      %s197 = scalar_select %p196, %s19, 1
      %p198 = scmp.lt.s32.totalorder %s194, 5
      %s199 = scalar_select %p198, %s194, 5
      %p200 = scmp.lt.s32.totalorder %s195, 1
      %s201 = scalar_select %p200, %s195, 1
      %s202 = smul.addr %s199, 2
      %s203 = sadd.s32 %s201, %s202
      %s204 = smul.addr %s197, 12
      %s205 = sadd.s32 %s203, %s204
      %s206 = smul.addr %s205, 4
      %s207 = scalar_lea.vmem %s1, %s206
      %p208 = pneg %p94
      %p209 = pneg %p91
      %p210 = pneg %p124
      %p211 = pneg %p121
      %s212 = smul.u32 2, %s21
      %p213 = scmp.lt.s32.totalorder %s19, 1
      %s214 = scalar_select %p213, %s19, 1
      %p215 = scmp.lt.s32.totalorder %s20, 0
      %s216 = scalar_select %p215, %s20, 0
      %p217 = scmp.lt.s32.totalorder %s212, 1
      %s218 = scalar_select %p217, %s212, 1
      %s219 = smul.addr %s216, 2
      %s220 = sadd.s32 %s218, %s219
      %s221 = smul.addr %s214, 2
      %s222 = sadd.s32 %s220, %s221
      %s223 = smul.addr %s222, 8
      %s224 = scalar_lea.vmem %s2, %s223
      %p225 = scmp.lt.s32.totalorder %s19, 1
      %s226 = scalar_select %p225, %s19, 1
      %p227 = scmp.lt.s32.totalorder %s20, 0
      %s228 = scalar_select %p227, %s20, 0
      %p229 = scmp.lt.s32.totalorder %s22, 0
      %s230 = scalar_select %p229, %s22, 0
      %s231 = sadd.s32 %s230, %s228
      %s232 = sadd.s32 %s231, %s226
      %s233 = smul.addr %s232, 4
      %s234 = scalar_lea.vmem %s0, %s233
      %s235 = smul.u32 6, %s22
      %s236 = smul.u32 2, %s21
      %p237 = scmp.lt.s32.totalorder %s19, 1
      %s238 = scalar_select %p237, %s19, 1
      %p239 = scmp.lt.s32.totalorder %s235, 5
      %s240 = scalar_select %p239, %s235, 5
      %p241 = scmp.lt.s32.totalorder %s236, 1
      %s242 = scalar_select %p241, %s236, 1
      %s243 = smul.addr %s240, 2
      %s244 = sadd.s32 %s242, %s243
      %s245 = smul.addr %s238, 12
      %s246 = sadd.s32 %s244, %s245
      %s247 = smul.addr %s246, 4
      %s248 = scalar_lea.vmem %s1, %s247
      %s249 = smul.u32 6, %s22
      %s250 = smul.u32 2, %s21
      %s251 = smul.u32 2, %s21
      %p252 = scmp.lt.s32.totalorder %s19, 1
      %s253 = scalar_select %p252, %s19, 1
      %p254 = scmp.lt.s32.totalorder %s20, 0
      %s255 = scalar_select %p254, %s20, 0
      %p256 = scmp.lt.s32.totalorder %s251, 1
      %s257 = scalar_select %p256, %s251, 1
      %s258 = smul.addr %s255, 2
      %s259 = sadd.s32 %s257, %s258
      %s260 = smul.addr %s253, 2
      %s261 = sadd.s32 %s259, %s260
      %s262 = smul.addr %s261, 8
      %s263 = scalar_lea.vmem %s2, %s262
      %s264 = smul.u32 2, %s21
      %p266 = scmp.eq.s32.totalorder %s22, 0
      // Predicated region
      $region29: #{odconv2d_forward.1} parent=27 // pred_check
        %p267 = pneg %p266
      $region30: #{odconv2d_forward.1} parent=27 // pred_check_branch
        %269 = sbr.rel (%p267) target = $region32
      $region31: #{odconv2d_forward.1} parent=27 // pred_region
        %270 = vst [vmem:[#allocation2] sm:$0xff] 0.0
        %271 = vst [vmem:[#allocation2 + $0x8] sm:$0xff] 0.0
      $region32: #{odconv2d_forward.1} parent=27 // pred_fallthru
        _
      %v272 = vld [vmem:[#allocation2] sm:$0xff]
      %v273 = vld [vmem:[#allocation2 + $0x8] sm:$0xff]
      %v274 = vld [vmem:[%s234] sm:$0xf]
      %v275 = vld [vmem:[%s248] sm:$0xff]
      %v276 = vld [vmem:[%s248 + $0x8] sm:$0xff]
      %v277 = vld [vmem:[%s248 + $0x10] sm:$0xff]
      %v278 = vld [vmem:[%s248 + $0x18] sm:$0xff]
      %v279 = vld [vmem:[%s248 + $0x20] sm:$0xff]
      %v280 = vld [vmem:[%s248 + $0x28] sm:$0xff]
      %v287 = vunpack.c.l.b16 %v275
      %v288 = vunpack.c.h.b16 %v275
      %v289 = vunpack.c.l.b16 %v276
      %v290 = vunpack.c.h.b16 %v276
      %v291 = vunpack.c.l.b16 %v277
      %v292 = vunpack.c.h.b16 %v277
      %v293 = vunpack.c.l.b16 %v278
      %v294 = vunpack.c.h.b16 %v278
      %v295 = vunpack.c.l.b16 %v279
      %v296 = vunpack.c.h.b16 %v279
      %v297 = vunpack.c.l.b16 %v280
      %v298 = vunpack.c.h.b16 %v280
      %v299 = vpack.c.b16 %v289, %v287
      %v300 = vpack.c.b16 %v290, %v288
      %v301 = vpack.c.b16 %v293, %v291
      %v302 = vpack.c.b16 %v294, %v292
      %v303 = vpack.c.b16 %v297, %v295
      %v304 = vpack.c.b16 %v298, %v296
      %vm311 = vcmask 392192
      %v313 = vsel %vm311, %v274, 0
      %315 = vmatprep.subr.bf16.mxu0 %v300
      %316 = vmatpush1.bf16.msra.mxu0 %v299
      %317 = vmatprep.subr.bf16.mxu0 %v302
      %318 = vmatpush1.bf16.msra.mxu0 %v301
      %319 = vmatprep.subr.bf16.mxu0 %v304
      %320 = vmatpush1.bf16.msra.mxu0 %v303
      %321 = vmatprep.subr.bf16.mxu0 0
      %322 = vmatpush1.bf16.msra.mxu0 0
      %323 = vmatprep.subr.bf16.mxu0 0
      %324 = vmatpush1.bf16.msra.mxu0 0
      %325 = vmatprep.subr.bf16.mxu0 0
      %326 = vmatpush1.bf16.msra.mxu0 0
      %327 = vmatprep.subr.bf16.mxu0 0
      %328 = vmatpush1.bf16.msra.mxu0 0
      %329 = vmatprep.subr.bf16.mxu0 0
      %330 = vmatpush1.bf16.msra.mxu0 0
      %331 = vmatprep.subr.bf16.mxu0 0
      %332 = vmatpush1.bf16.msra.mxu0 0
      %333 = vmatprep.subr.bf16.mxu0 0
      %334 = vmatpush1.bf16.msra.mxu0 0
      %335 = vmatprep.subr.bf16.mxu0 0
      %336 = vmatpush1.bf16.msra.mxu0 0
      %337 = vmatprep.subr.bf16.mxu0 0
      %338 = vmatpush1.bf16.msra.mxu0 0
      %339 = vmatprep.subr.bf16.mxu0 0
      %340 = vmatpush1.bf16.msra.mxu0 0
      %341 = vmatprep.subr.bf16.mxu0 0
      %342 = vmatpush1.bf16.msra.mxu0 0
      %343 = vmatprep.subr.bf16.mxu0 0
      %344 = vmatpush1.bf16.msra.mxu0 0
      %345 = vmatprep.subr.bf16.mxu0 0
      %346 = vmatpush1.bf16.msra.mxu0 0
      %347 = vmatprep.mubr.bf16.mxu0 0
      %348 = vmatmul.mubr.bf16.gmra.mrb[0].mxu0 %v313
      %v349 = vpop.f32.mrb[0].mxu0
      %v350 = vadd.f32 0.0, %v349
      %v351 = vpop.f32.mrb[0].mxu0
      %v352 = vadd.f32 0.0, %v351
      %v353 = vpop.f32.mrb[0].mxu0
      %v354 = vpop.f32.mrb[0].mxu0
      %355 = vdwg.mxu0
      %v356 = vadd.f32 %v272, %v350
      %v357 = vadd.f32 %v273, %v352
      %358 = vst [vmem:[#allocation2] sm:$0xff] %v356
      %359 = vst [vmem:[#allocation2 + $0x8] sm:$0xff] %v357
      // Predicated region
      $region33: #{odconv2d_forward.1} parent=27 // pred_check
        %p360 = pneg %p266
      $region34: #{odconv2d_forward.1} parent=27 // pred_check_branch
        %362 = sbr.rel (%p360) target = $region36
      $region35: #{odconv2d_forward.1} parent=27 // pred_region
        %v363 = vld [vmem:[#allocation2] sm:$0xff]
        %v364 = vld [vmem:[#allocation2 + $0x8] sm:$0xff]
        %365 = vst [vmem:[%s263] sm:$0xff] %v363
        %366 = vst [vmem:[%s263 + $0x8] sm:$0xff] %v364
      $region36: #{odconv2d_forward.1} parent=27 // pred_fallthru
        _
      %s367 = smul.u32 2, %s21
      %p368 = scmp.lt.s32.totalorder %s19, 1
      %s369 = scalar_select %p368, %s19, 1
      %p370 = scmp.lt.s32.totalorder %s20, 0
      %s371 = scalar_select %p370, %s20, 0
      %p372 = scmp.lt.s32.totalorder %s367, 1
      %s373 = scalar_select %p372, %s367, 1
      %s374 = smul.addr %s371, 2
      %s375 = sadd.s32 %s373, %s374
      %s376 = smul.addr %s369, 2
      %s377 = sadd.s32 %s375, %s376
      %s378 = smul.addr %s377, 8
      %s379 = scalar_lea.vmem %s2, %s378
      // Predicated region
      $region37: #{odconv2d_forward.1} parent=27 // pred_check
        %p380 = pneg %p121
      $region38: #{odconv2d_forward.1} parent=27 // pred_check_branch
        %382 = sbr.rel (%p380) target = $region40
      $region39: #{odconv2d_forward.1} parent=27 // pred_region
        %s383 = smul.u32 2, %s21
      $region40: #{odconv2d_forward.1} parent=27 // pred_fallthru
        _
    $region28: #{odconv2d_forward.1} parent=5 // pred_fallthru
      _
    %p384 = scmp.le.s32.totalorder 2, %s8
    // Predicated region
    $region41: #{odconv2d_forward.1} parent=5 // pred_check
      %p385 = pneg %p384
    $region42: #{odconv2d_forward.1} parent=5 // pred_check_branch
      %387 = sbr.rel (%p385) target = $region44
    $region43: #{odconv2d_forward.1} parent=5 // pred_region
      %s388 = ssub.s32 %s8, 2
      // Predicated region
      $region45: #{odconv2d_forward.1} parent=43 // pred_check
        %p389 = pneg %p127
      $region46: #{odconv2d_forward.1} parent=43 // pred_check_branch
        %391 = sbr.rel (%p389) target = $region48
      $region47: #{odconv2d_forward.1} parent=43 // pred_region
        %s392 = smul.u32 2, %s25
        %p393 = scmp.lt.s32.totalorder %s23, 1
        %s394 = scalar_select %p393, %s23, 1
        %p395 = scmp.lt.s32.totalorder %s24, 0
        %s396 = scalar_select %p395, %s24, 0
        %p397 = scmp.lt.s32.totalorder %s392, 1
        %s398 = scalar_select %p397, %s392, 1
        %s399 = smul.addr %s396, 2
        %s400 = sadd.s32 %s398, %s399
        %s401 = smul.addr %s394, 2
        %s402 = sadd.s32 %s400, %s401
        %s403 = smul.addr %s402, 8
        %s404 = scalar_lea.vmem %s2, %s403
      $region48: #{odconv2d_forward.1} parent=43 // pred_fallthru
        _
    $region44: #{odconv2d_forward.1} parent=5 // pred_fallthru
      _
  $region6: #{odconv2d_forward.1} parent=0 // loop_footer
    %s12 = sadd.s32 1, %s8
  $region7: #{odconv2d_forward.1} parent=0 // loop_footer_branch
    %7 = sbr.rel target = $region3
  $region8: #{odconv2d_forward.1} parent=0 // loop_exit
    _

</llo_original>
